<compile_context>
chip_gen: v6e
topology: v6e:2x2x1
jax: 0.10.0
libtpu: 0.0.40
codegen_flags: <defaults>
</compile_context>

<pallas_src>
import functools

import jax
import jax.numpy as jnp
from jax import lax
from jax.experimental import pallas as pl
from jax.experimental.pallas import tpu as pltpu


def _leaky_relu(x, slope=0.2):
    # Identical to LeakyReLU(0.2) for slope in (0,1): mul + max (no select).
    return jnp.maximum(x, slope * x)


def netc5_kernel(x_ref, w1_ref, w2345_ref, wh_ref, bh_ref, tc_ref, ce_ref,
                 *, n_chunks, chunk, compute_dtype):
    cdt = jnp.dtype(compute_dtype)

    # Weights are tiny and grid-resident; load once per grid step.
    w1 = w1_ref[...]          # (ndf, d)
    w2 = w2345_ref[0]         # (ndf, ndf)
    w3 = w2345_ref[1]
    w4 = w2345_ref[2]
    w5 = w2345_ref[3]
    wh = wh_ref[...]          # (nc, ndf)
    bh = bh_ref[...]          # (nc, 1) f32, broadcasts over token lanes

    def one_chunk(c, carry):
        off = pl.multiple_of(c * chunk, 128)
        # In-kernel cast of the f32 input tile (removes the wrapper astype).
        x = x_ref[0, :, pl.ds(off, chunk)].astype(cdt)          # (d, chunk)

        # trunk: conv1x1 -> LeakyReLU (x4), final conv1x1.  f32 accumulation,
        # activation applied on the downcast result (packed bf16 VALU on
        # v6e/v7x; no-op cast on the strict f32 path).
        h = _leaky_relu(
            jnp.dot(w1, x, preferred_element_type=jnp.float32).astype(cdt))
        h = _leaky_relu(
            jnp.dot(w2, h, preferred_element_type=jnp.float32).astype(cdt))
        h = _leaky_relu(
            jnp.dot(w3, h, preferred_element_type=jnp.float32).astype(cdt))
        h = _leaky_relu(
            jnp.dot(w4, h, preferred_element_type=jnp.float32).astype(cdt))
        tc = jnp.dot(w5, h, preferred_element_type=jnp.float32)  # (ndf, chunk)
        tc_ref[0, :, pl.ds(off, chunk)] = tc.astype(tc_ref.dtype)

        # head: LeakyReLU -> conv1x1 (+ bias).
        hh = _leaky_relu(tc.astype(cdt))
        ce = jnp.dot(wh, hh, preferred_element_type=jnp.float32) + bh
        ce_ref[0, :, pl.ds(off, chunk)] = ce.astype(ce_ref.dtype)
        return carry

    if n_chunks == 1:
        one_chunk(0, 0)
    else:
        lax.fori_loop(0, n_chunks, one_chunk, 0, unroll=True)


def _pick_token_tile(l_pad, target):
    """Largest multiple of 128 dividing l_pad and <= target (l_pad % 128 == 0)."""
    best = 128
    t = 128
    while t <= min(l_pad, target):
        if l_pad % t == 0:
            best = t
        t += 128
    return best


def _pick_chunk(tl):
    """Largest of 512/256/128 dividing tl (tl is a multiple of 128)."""
    for c in (512, 256, 128):
        if tl % c == 0:
            return c
    return tl


@functools.partial(jax.jit,
                   static_argnames=("compute_dtype", "out_dtype", "target_tl"))
def netc5_forward(x_ncl, params, *, compute_dtype=jnp.bfloat16,
                  out_dtype=None, target_tl=2048):
    """x_ncl: (N, d, L) float32.  Returns (tc, ce) in NCL layout."""
    N, d, L = x_ncl.shape
    w1, w2345, wh, bh = params
    ndf = w1.shape[0]
    nc = wh.shape[0]

    cdt = jnp.dtype(compute_dtype)
    odt = jnp.dtype(out_dtype) if out_dtype is not None else cdt

    # Pad the token axis up to a multiple of 128: lane-dense, unmasked stores.
    L_pad = ((L + 127) // 128) * 128
    x_in = x_ncl                      # stays f32; cast happens inside the kernel
    if L_pad != L:
        x_in = jnp.pad(x_in, ((0, 0), (0, 0), (0, L_pad - L)))

    tL = _pick_token_tile(L_pad, target_tl)
    chunk = _pick_chunk(tL)
    n_chunks = tL // chunk
    grid = (L_pad // tL, N)           # token tiles first: clean 2-TC split on v7x

    # Weights are tiny; casting them in the wrapper is negligible.
    w1_in = w1.astype(cdt)
    w2345_in = w2345.astype(cdt)
    wh_in = wh.astype(cdt)
    bh_in = bh.astype(jnp.float32)    # added to the f32 accumulator

    flops = 2 * N * L_pad * (d * ndf + 4 * ndf * ndf + ndf * nc)
    bytes_accessed = (
        x_in.size * x_in.dtype.itemsize
        + (w1_in.size + w2345_in.size + wh_in.size) * cdt.itemsize
        + bh_in.size * 4
        + N * L_pad * (ndf + nc) * odt.itemsize)

    kernel = functools.partial(netc5_kernel, n_chunks=n_chunks, chunk=chunk,
                               compute_dtype=cdt)

    tc, ce = pl.pallas_call(
        kernel,
        out_shape=(
            jax.ShapeDtypeStruct((N, ndf, L_pad), odt),
            jax.ShapeDtypeStruct((N, nc, L_pad), odt),
        ),
        grid_spec=pltpu.PrefetchScalarGridSpec(
            num_scalar_prefetch=0,
            grid=grid,
            in_specs=[
                pl.BlockSpec((1, d, tL), lambda l, n: (n, 0, l)),      # x (f32)
                pl.BlockSpec((ndf, d), lambda l, n: (0, 0)),           # w1
                pl.BlockSpec((4, ndf, ndf), lambda l, n: (0, 0, 0)),   # w2..w5
                pl.BlockSpec((nc, ndf), lambda l, n: (0, 0)),          # wh
                pl.BlockSpec((nc, 1), lambda l, n: (0, 0)),            # bh
            ],
            out_specs=[
                pl.BlockSpec((1, ndf, tL), lambda l, n: (n, 0, l)),    # tc
                pl.BlockSpec((1, nc, tL), lambda l, n: (n, 0, l)),     # ce
            ],
        ),
        compiler_params=pltpu.CompilerParams(
            dimension_semantics=("parallel", "parallel")),
        cost_estimate=pl.CostEstimate(
            flops=flops, transcendentals=0, bytes_accessed=bytes_accessed),
    )(x_in, w1_in, w2345_in, wh_in, bh_in)

    if L_pad != L:
        tc = tc[:, :, :L]
        ce = ce[:, :, :L]
    return tc, ce


def init_params(key, d, ndf, nc):
    """Deterministic synthetic weights.  Conv1d(k=1) weight (Cout, Cin, 1) is
    stored as (Cout, Cin); the four hidden convs are packed into one slab."""
    keys = jax.random.split(key, 7)

    def w(k, cout, cin):
        scale = 1.0 / jnp.sqrt(jnp.float32(cin))
        return jax.random.normal(k, (cout, cin), jnp.float32) * scale

    w1 = w(keys[0], ndf, d)
    w2345 = jnp.stack([w(keys[i], ndf, ndf) for i in range(1, 5)], axis=0)
    wh = w(keys[5], nc, ndf)
    bh = jax.random.normal(keys[6], (nc, 1), jnp.float32) * 0.01
    return (w1, w2345, wh, bh)


def reference_forward(x_ncl, params):
    """Pure-JAX f32 reference matching PyTorch netC5 semantics (NCL layout)."""
    w1, w2345, wh, bh = params
    lrelu = lambda v: jnp.where(v > 0, v, 0.2 * v)
    conv = lambda w, h: jnp.einsum("oc,ncl->nol", w, h)
    h = lrelu(conv(w1, x_ncl))
    for i in range(3):
        h = lrelu(conv(w2345[i], h))
    tc = conv(w2345[3], h)
    ce = conv(wh, lrelu(tc)) + bh[None, :, :]
    return tc, ce


def _check(got, want, atol, rtol):
    return jnp.allclose(got.astype(jnp.float32), want, atol=atol, rtol=rtol)


if __name__ == "__main__":
    # shapes consistent with the module: netC5(d=16, ndf=32, nc=8)
    d, ndf, nc = 16, 32, 8
    key = jax.random.PRNGKey(0)
    kx, kp = jax.random.split(key)
    params = init_params(kp, d, ndf, nc)

    # Case 1: tiny L (padding path), strict f32 operands/outputs.
    N, L = 2, 16
    x = jax.random.normal(kx, (N, d, L), jnp.float32)
    tc_ref, ce_ref = reference_forward(x, params)
    tc, ce = netc5_forward(x, params, compute_dtype=jnp.float32)
    jax.block_until_ready((tc, ce))
    assert tc.shape == (N, ndf, L) and ce.shape == (N, nc, L)
    assert _check(tc, tc_ref, 1e-5, 1e-4)
    assert _check(ce, ce_ref, 1e-5, 1e-4)

    # Fast path on the same input: bf16 operands + bf16 outputs.
    tc_bf, ce_bf = netc5_forward(x, params, compute_dtype=jnp.bfloat16)
    jax.block_until_ready((tc_bf, ce_bf))
    assert _check(tc_bf, tc_ref, 1e-1, 1e-1)
    assert _check(ce_bf, ce_ref, 1e-1, 1e-1)

    # Case 2: multi-chunk lane-dense path (L = 1024 -> tL = 1024, 2x512 chunks).
    N2, L2 = 2, 1024
    x2 = jax.random.normal(jax.random.fold_in(kx, 1), (N2, d, L2), jnp.float32)
    tc2_ref, ce2_ref = reference_forward(x2, params)
    tc2, ce2 = netc5_forward(x2, params, compute_dtype=jnp.float32)
    jax.block_until_ready((tc2, ce2))
    assert tc2.shape == (N2, ndf, L2) and ce2.shape == (N2, nc, L2)
    assert _check(tc2, tc2_ref, 1e-5, 1e-4)
    assert _check(ce2, ce2_ref, 1e-5, 1e-4)
    tc2_bf, ce2_bf = netc5_forward(x2, params, compute_dtype=jnp.bfloat16)
    jax.block_until_ready((tc2_bf, ce2_bf))
    assert _check(tc2_bf, tc2_ref, 1e-1, 1e-1)
    assert _check(ce2_bf, ce2_ref, 1e-1, 1e-1)

    # Case 3: awkward L (not a multiple of 128) -> pad + slice back.
    N3, L3 = 1, 200
    x3 = jax.random.normal(jax.random.fold_in(kx, 2), (N3, d, L3), jnp.float32)
    tc3_ref, ce3_ref = reference_forward(x3, params)
    tc3, ce3 = netc5_forward(x3, params, compute_dtype=jnp.float32)
    jax.block_until_ready((tc3, ce3))
    assert tc3.shape == (N3, ndf, L3) and ce3.shape == (N3, nc, L3)
    assert _check(tc3, tc3_ref, 1e-5, 1e-4)
    assert _check(ce3, ce3_ref, 1e-5, 1e-4)

    print("KERNEL_OK")
</pallas_src>

<mosaic_0001>
module attributes {stable_mosaic.version = 11 : i64} {
  func.func @netc5_kernel(%arg0: i32, %arg1: i32, %arg2: memref<1x16x128xf32, #tpu.memory_space<vmem>>, %arg3: memref<32x16xf32, #tpu.memory_space<vmem>>, %arg4: memref<4x32x32xf32, #tpu.memory_space<vmem>>, %arg5: memref<8x32xf32, #tpu.memory_space<vmem>>, %arg6: memref<8x1xf32, #tpu.memory_space<vmem>>, %arg7: memref<1x32x128xf32, #tpu.memory_space<vmem>>, %arg8: memref<1x8x128xf32, #tpu.memory_space<vmem>>) attributes {dimension_semantics = [#tpu.dimension_semantics<parallel>, #tpu.dimension_semantics<parallel>], iteration_bounds = array<i64: 1, 2>, scalar_prefetch = 0 : i64, scratch_operands = 0 : i64, tpu.core_type = #tpu.core_type<tc>, window_params = [{transform_indices = @transform_0, window_bounds = array<i64: 1, 16, 128>}, {pipeline_mode = #tpu.pipeline_mode<synchronous>, transform_indices = @transform_1, window_bounds = array<i64: 32, 16>}, {pipeline_mode = #tpu.pipeline_mode<synchronous>, transform_indices = @transform_2, window_bounds = array<i64: 4, 32, 32>}, {pipeline_mode = #tpu.pipeline_mode<synchronous>, transform_indices = @transform_3, window_bounds = array<i64: 8, 32>}, {pipeline_mode = #tpu.pipeline_mode<synchronous>, transform_indices = @transform_4, window_bounds = array<i64: 8, 1>}, {transform_indices = @transform_5, window_bounds = array<i64: 1, 32, 128>}, {transform_indices = @transform_6, window_bounds = array<i64: 1, 8, 128>}]} {
    %c0 = arith.constant 0 : index
    %c0_0 = arith.constant 0 : index
    %0 = vector.load %arg3[%c0, %c0_0] : memref<32x16xf32, #tpu.memory_space<vmem>>, vector<32x16xf32>
    %c0_1 = arith.constant 0 : index
    %c0_2 = arith.constant 0 : index
    %c0_3 = arith.constant 0 : index
    %1 = vector.load %arg4[%c0_1, %c0_2, %c0_3] : memref<4x32x32xf32, #tpu.memory_space<vmem>>, vector<1x32x32xf32>
    %2 = vector.shape_cast %1 : vector<1x32x32xf32> to vector<32x32xf32>
    %c1 = arith.constant 1 : index
    %c0_4 = arith.constant 0 : index
    %c0_5 = arith.constant 0 : index
    %3 = vector.load %arg4[%c1, %c0_4, %c0_5] : memref<4x32x32xf32, #tpu.memory_space<vmem>>, vector<1x32x32xf32>
    %4 = vector.shape_cast %3 : vector<1x32x32xf32> to vector<32x32xf32>
    %c2 = arith.constant 2 : index
    %c0_6 = arith.constant 0 : index
    %c0_7 = arith.constant 0 : index
    %5 = vector.load %arg4[%c2, %c0_6, %c0_7] : memref<4x32x32xf32, #tpu.memory_space<vmem>>, vector<1x32x32xf32>
    %6 = vector.shape_cast %5 : vector<1x32x32xf32> to vector<32x32xf32>
    %c3 = arith.constant 3 : index
    %c0_8 = arith.constant 0 : index
    %c0_9 = arith.constant 0 : index
    %7 = vector.load %arg4[%c3, %c0_8, %c0_9] : memref<4x32x32xf32, #tpu.memory_space<vmem>>, vector<1x32x32xf32>
    %8 = vector.shape_cast %7 : vector<1x32x32xf32> to vector<32x32xf32>
    %c0_10 = arith.constant 0 : index
    %c0_11 = arith.constant 0 : index
    %9 = vector.load %arg5[%c0_10, %c0_11] : memref<8x32xf32, #tpu.memory_space<vmem>>, vector<8x32xf32>
    %c0_12 = arith.constant 0 : index
    %c0_13 = arith.constant 0 : index
    %10 = vector.load %arg6[%c0_12, %c0_13] : memref<8x1xf32, #tpu.memory_space<vmem>>, vector<8x1xf32>
    %c0_i32 = arith.constant 0 : i32
    %11 = tpu.assume_multiple %c0_i32, 128 : i32
    %c0_14 = arith.constant 0 : index
    %c0_15 = arith.constant 0 : index
    %12 = arith.index_cast %11 : i32 to index
    %13 = vector.load %arg2[%c0_14, %c0_15, %12] : memref<1x16x128xf32, #tpu.memory_space<vmem>>, vector<1x16x128xf32>
    %14 = vector.shape_cast %13 : vector<1x16x128xf32> to vector<16x128xf32>
    %cst = arith.constant dense<0.000000e+00> : vector<32x128xf32>
    %15 = tpu.matmul %0, %14, %cst {dimension_numbers = #tpu.dot_dimension_numbers<[1], [0], [0], [1], [0, 0, 1, 1], [], []>} : vector<32x16xf32>, vector<16x128xf32>, vector<32x128xf32> -> vector<32x128xf32>
    %cst_16 = arith.constant 2.000000e-01 : f32
    %16 = vector.broadcast %cst_16 : f32 to vector<32x128xf32>
    %17 = arith.mulf %16, %15 : vector<32x128xf32>
    %18 = arith.maximumf %15, %17 : vector<32x128xf32>
    %cst_17 = arith.constant dense<0.000000e+00> : vector<32x128xf32>
    %19 = tpu.matmul %2, %18, %cst_17 {dimension_numbers = #tpu.dot_dimension_numbers<[1], [0], [0], [1], [0, 0, 1, 1], [], []>} : vector<32x32xf32>, vector<32x128xf32>, vector<32x128xf32> -> vector<32x128xf32>
    %cst_18 = arith.constant 2.000000e-01 : f32
    %20 = vector.broadcast %cst_18 : f32 to vector<32x128xf32>
    %21 = arith.mulf %20, %19 : vector<32x128xf32>
    %22 = arith.maximumf %19, %21 : vector<32x128xf32>
    %cst_19 = arith.constant dense<0.000000e+00> : vector<32x128xf32>
    %23 = tpu.matmul %4, %22, %cst_19 {dimension_numbers = #tpu.dot_dimension_numbers<[1], [0], [0], [1], [0, 0, 1, 1], [], []>} : vector<32x32xf32>, vector<32x128xf32>, vector<32x128xf32> -> vector<32x128xf32>
    %cst_20 = arith.constant 2.000000e-01 : f32
    %24 = vector.broadcast %cst_20 : f32 to vector<32x128xf32>
    %25 = arith.mulf %24, %23 : vector<32x128xf32>
    %26 = arith.maximumf %23, %25 : vector<32x128xf32>
    %cst_21 = arith.constant dense<0.000000e+00> : vector<32x128xf32>
    %27 = tpu.matmul %6, %26, %cst_21 {dimension_numbers = #tpu.dot_dimension_numbers<[1], [0], [0], [1], [0, 0, 1, 1], [], []>} : vector<32x32xf32>, vector<32x128xf32>, vector<32x128xf32> -> vector<32x128xf32>
    %cst_22 = arith.constant 2.000000e-01 : f32
    %28 = vector.broadcast %cst_22 : f32 to vector<32x128xf32>
    %29 = arith.mulf %28, %27 : vector<32x128xf32>
    %30 = arith.maximumf %27, %29 : vector<32x128xf32>
    %cst_23 = arith.constant dense<0.000000e+00> : vector<32x128xf32>
    %31 = tpu.matmul %8, %30, %cst_23 {dimension_numbers = #tpu.dot_dimension_numbers<[1], [0], [0], [1], [0, 0, 1, 1], [], []>} : vector<32x32xf32>, vector<32x128xf32>, vector<32x128xf32> -> vector<32x128xf32>
    %c0_24 = arith.constant 0 : index
    %c0_25 = arith.constant 0 : index
    %32 = arith.index_cast %11 : i32 to index
    %33 = vector.load %arg7[%c0_24, %c0_25, %32] : memref<1x32x128xf32, #tpu.memory_space<vmem>>, vector<1x32x128xf32>
    %34 = vector.shape_cast %33 : vector<1x32x128xf32> to vector<32x128xf32>
    %35 = vector.shape_cast %31 : vector<32x128xf32> to vector<1x32x128xf32>
    tpu.vector_store %arg7[%c0_24, %c0_25, %32], %35 {strides = array<i32>} : memref<1x32x128xf32, #tpu.memory_space<vmem>>, vector<1x32x128xf32>,
    %cst_26 = arith.constant 2.000000e-01 : f32
    %36 = vector.broadcast %cst_26 : f32 to vector<32x128xf32>
    %37 = arith.mulf %36, %31 : vector<32x128xf32>
    %38 = arith.maximumf %31, %37 : vector<32x128xf32>
    %cst_27 = arith.constant dense<0.000000e+00> : vector<8x128xf32>
    %39 = tpu.matmul %9, %38, %cst_27 {dimension_numbers = #tpu.dot_dimension_numbers<[1], [0], [0], [1], [0, 0, 1, 1], [], []>} : vector<8x32xf32>, vector<32x128xf32>, vector<8x128xf32> -> vector<8x128xf32>
    %40 = vector.broadcast %10 : vector<8x1xf32> to vector<8x128xf32>
    %41 = arith.addf %39, %40 : vector<8x128xf32>
    %c0_28 = arith.constant 0 : index
    %c0_29 = arith.constant 0 : index
    %42 = arith.index_cast %11 : i32 to index
    %43 = vector.load %arg8[%c0_28, %c0_29, %42] : memref<1x8x128xf32, #tpu.memory_space<vmem>>, vector<1x8x128xf32>
    %44 = vector.shape_cast %43 : vector<1x8x128xf32> to vector<8x128xf32>
    %45 = vector.shape_cast %41 : vector<8x128xf32> to vector<1x8x128xf32>
    tpu.vector_store %arg8[%c0_28, %c0_29, %42], %45 {strides = array<i32>} : memref<1x8x128xf32, #tpu.memory_space<vmem>>, vector<1x8x128xf32>,
    return
  }
  func.func @transform_0(%arg0: i32, %arg1: i32) -> (i32, i32, i32) {
    %c0_i32 = arith.constant 0 : i32
    %c0_i32_0 = arith.constant 0 : i32
    return %arg1, %c0_i32, %arg0 : i32, i32, i32
  }
  func.func @transform_1(%arg0: i32, %arg1: i32) -> (i32, i32) {
    %c0_i32 = arith.constant 0 : i32
    %c0_i32_0 = arith.constant 0 : i32
    %c0_i32_1 = arith.constant 0 : i32
    return %c0_i32, %c0_i32_0 : i32, i32
  }
  func.func @transform_2(%arg0: i32, %arg1: i32) -> (i32, i32, i32) {
    %c0_i32 = arith.constant 0 : i32
    %c0_i32_0 = arith.constant 0 : i32
    %c0_i32_1 = arith.constant 0 : i32
    %c0_i32_2 = arith.constant 0 : i32
    return %c0_i32, %c0_i32_0, %c0_i32_1 : i32, i32, i32
  }
  func.func @transform_3(%arg0: i32, %arg1: i32) -> (i32, i32) {
    %c0_i32 = arith.constant 0 : i32
    %c0_i32_0 = arith.constant 0 : i32
    %c0_i32_1 = arith.constant 0 : i32
    return %c0_i32, %c0_i32_0 : i32, i32
  }
  func.func @transform_4(%arg0: i32, %arg1: i32) -> (i32, i32) {
    %c0_i32 = arith.constant 0 : i32
    %c0_i32_0 = arith.constant 0 : i32
    %c0_i32_1 = arith.constant 0 : i32
    return %c0_i32, %c0_i32_0 : i32, i32
  }
  func.func @transform_5(%arg0: i32, %arg1: i32) -> (i32, i32, i32) {
    %c0_i32 = arith.constant 0 : i32
    %c0_i32_0 = arith.constant 0 : i32
    return %arg1, %c0_i32, %arg0 : i32, i32, i32
  }
  func.func @transform_6(%arg0: i32, %arg1: i32) -> (i32, i32, i32) {
    %c0_i32 = arith.constant 0 : i32
    %c0_i32_0 = arith.constant 0 : i32
    return %arg1, %c0_i32, %arg0 : i32, i32, i32
  }
}

</mosaic_0001>

<llo_original>
// kernel: netc5_forward.1
$region0: #{netc5_forward.1}
  #allocation0 [shape = 'u32[]', space=smem, size = 0x4, offset = 0x4, fixed_abs, tag = 'smem constant byte address 0x4 - core index']
  #allocation1 [shape = 'u32[144,128]{1,0:T(1,128)}', space=vmem, size = 0x12000, scoped, tag = 'internal scratch']
  %s0 = inlined_call_operand.vmem [shape: f32[2,16,128], index: 0, kind: input, shape index: {}]
  %s1 = inlined_call_operand.vmem [shape: f32[32,16], index: 1, kind: input, shape index: {}]
  %s2 = inlined_call_operand.hbm [shape: f32[4,32,32], index: 2, kind: input, shape index: {}]
  %s3 = inlined_call_operand.vmem [shape: f32[8,32], index: 3, kind: input, shape index: {}]
  %s4 = inlined_call_operand.vmem [shape: f32[8,1], index: 4, kind: input, shape index: {}]
  %s5 = inlined_call_operand.vmem [shape: f32[2,32,128], index: 5, kind: output, shape index: {0}]
  %s6 = inlined_call_operand.hbm [shape: f32[2,8,128], index: 6, kind: output, shape index: {1}]
  %7 = xla_tuple %s5, %s6
  %s8 = sld [smem:[#allocation0]]
  $region65: #{netc5_forward.1} parent=0
    _
  %s10 = ssub.s32 1, %s8
  %s11 = scalar_select 0, %s10, %s8
  $region1: #{netc5_forward.1} parent=0
    #allocation2 [shape = 'u8[65536]{0}', space=vmem, size = 0x10000, scoped, tag = 'input window, operand 2, single buffered']
    #allocation3 [shape = 's32[2]{0}', space=sflag, size = 0x8, scoped, tag = 'scoped memory for netc5_forward.1']
    #allocation4 [shape = 's32[2]{0}', space=sflag, size = 0x8, scoped, tag = 'scoped memory for netc5_forward.1']
    #allocation5 [shape = 'u8[8192]{0}', space=vmem, size = 0x2000, scoped, tag = 'output window, operand 1']
    %12 = vsyncpa [#allocation3], 0
    %13 = vsyncpa [#allocation4], 0
    %s14 = scalar_lea.sflag [#allocation4], 1
    %15 = vsyncpa %s14, 0
    loop: start=0, step=1, limit=4
    $region2: #{netc5_forward.1} parent=1 // loop_pre_header
      _
    $region3: #{netc5_forward.1} parent=1 // loop_header
      %s17 = sphi 0, %s21
      %p18 = scmp.ge.s32.totalorder %s17, 4
      %s24 = sphi 0, %s36
      %s25 = sphi 0, %s32
      %s26 = sphi 0, %s24
      %s27 = sphi 0, %s25
      %s28 = sphi 0, %s26
      %s29 = sphi 0, %s27
      %s41 = sphi 0, %s43
      %s44 = sphi 0, %s41
      %s45 = sphi 0, %s44
      %s61 = sphi 0, %s45
      %s65 = sphi 0, %s65
      %s67 = sphi 0, %s65
      %s68 = sphi 0, %s67
      %s82 = sphi 0, %s68
      %s86 = sphi 0, %s86
      %s88 = sphi 0, %s86
      %s89 = sphi 0, %s88
      %s103 = sphi 0, %s89
      %s107 = sphi 0, %s107
      %s109 = sphi 0, %s107
      %s110 = sphi 0, %s109
      %s124 = sphi 0, %s110
      %s128 = sphi 0, %s128
      %s130 = sphi 0, %s128
      %s131 = sphi 0, %s130
      %s145 = sphi 0, %s131
      %s153 = sphi 0, %s155
      %s156 = sphi 0, %s153
      %s157 = sphi 0, %s156
      %s173 = sphi 0, %s157
      %s181 = sphi 0, %s183
      %s184 = sphi 0, %s181
      %s185 = sphi 0, %s184
      %s201 = sphi 0, %s185
    $region4: #{netc5_forward.1} parent=1 // loop_header_branch
      %20 = sbr.rel (%p18) target = $region8
    $region5: #{netc5_forward.1} parent=1 // loop_body
      %s22 = ssub.s32 %s17, 1
      %s23 = ssub.s32 %s17, 2
      %s30 = sadd.s32 1, %s25
      %p31 = scmp.ge.s32.totalorder %s30, 2
      %s32 = scalar_select %p31, 0, %s30
      %s33 = sadd.s32 1, %s24
      %s34 = scalar_select %p31, %s33, %s24
      %p35 = scmp.ge.s32.totalorder %s34, 1
      %s36 = scalar_select %p35, 0, %s34
      %s37 = ssub.s32 %s25, %s32
      %s38 = ssub.s32 %s24, %s36
      %s39 = sor.u32 %s37, %s38
      %p40 = scmp.eq.s32.totalorder %s39, 0
      %s42 = sadd.s32 %s41, 1
      %s43 = scalar_select %p40, %s41, %s42
      %p46 = pneg %p40
      %p47 = scmp.eq.s32.totalorder %s17, 1
      %p48 = por %p46, %p47
      %p49 = scmp.ne.s32.totalorder %s41, %s44
      %p50 = scmp.eq.s32.totalorder %s17, 0
      %p51 = por %p49, %p50
      %p52 = scmp.ne.s32.totalorder %s41, %s44
      %p53 = scmp.eq.s32.totalorder %s22, 1
      %p54 = por %p52, %p53
      %p55 = scmp.ne.s32.totalorder %s44, %s45
      %p56 = scmp.eq.s32.totalorder %s22, 0
      %p57 = por %p55, %p56
      %p58 = scmp.ne.s32.totalorder %s44, %s45
      %p59 = scmp.eq.s32.totalorder %s23, 1
      %p60 = por %p58, %p59
      %p62 = scmp.ne.s32.totalorder %s45, %s61
      %p63 = scmp.eq.s32.totalorder %s23, 0
      %p64 = por %p62, %p63
      %s66 = sadd.s32 %s65, 1
      %p69 = scmp.eq.s32.totalorder %s17, 1
      %p70 = scmp.ne.s32.totalorder %s65, %s67
      %p71 = scmp.eq.s32.totalorder %s17, 0
      %p72 = por %p70, %p71
      %p73 = scmp.ne.s32.totalorder %s65, %s67
      %p74 = scmp.eq.s32.totalorder %s22, 1
      %p75 = por %p73, %p74
      %p76 = scmp.ne.s32.totalorder %s67, %s68
      %p77 = scmp.eq.s32.totalorder %s22, 0
      %p78 = por %p76, %p77
      %p79 = scmp.ne.s32.totalorder %s67, %s68
      %p80 = scmp.eq.s32.totalorder %s23, 1
      %p81 = por %p79, %p80
      %p83 = scmp.ne.s32.totalorder %s68, %s82
      %p84 = scmp.eq.s32.totalorder %s23, 0
      %p85 = por %p83, %p84
      %s87 = sadd.s32 %s86, 1
      %p90 = scmp.eq.s32.totalorder %s17, 1
      %p91 = scmp.ne.s32.totalorder %s86, %s88
      %p92 = scmp.eq.s32.totalorder %s17, 0
      %p93 = por %p91, %p92
      %p94 = scmp.ne.s32.totalorder %s86, %s88
      %p95 = scmp.eq.s32.totalorder %s22, 1
      %p96 = por %p94, %p95
      %p97 = scmp.ne.s32.totalorder %s88, %s89
      %p98 = scmp.eq.s32.totalorder %s22, 0
      %p99 = por %p97, %p98
      %p100 = scmp.ne.s32.totalorder %s88, %s89
      %p101 = scmp.eq.s32.totalorder %s23, 1
      %p102 = por %p100, %p101
      %p104 = scmp.ne.s32.totalorder %s89, %s103
      %p105 = scmp.eq.s32.totalorder %s23, 0
      %p106 = por %p104, %p105
      %s108 = sadd.s32 %s107, 1
      %p111 = scmp.eq.s32.totalorder %s17, 1
      %p112 = scmp.ne.s32.totalorder %s107, %s109
      %p113 = scmp.eq.s32.totalorder %s17, 0
      %p114 = por %p112, %p113
      %p115 = scmp.ne.s32.totalorder %s107, %s109
      %p116 = scmp.eq.s32.totalorder %s22, 1
      %p117 = por %p115, %p116
      %p118 = scmp.ne.s32.totalorder %s109, %s110
      %p119 = scmp.eq.s32.totalorder %s22, 0
      %p120 = por %p118, %p119
      %p121 = scmp.ne.s32.totalorder %s109, %s110
      %p122 = scmp.eq.s32.totalorder %s23, 1
      %p123 = por %p121, %p122
      %p125 = scmp.ne.s32.totalorder %s110, %s124
      %p126 = scmp.eq.s32.totalorder %s23, 0
      %p127 = por %p125, %p126
      %s129 = sadd.s32 %s128, 1
      %p132 = scmp.eq.s32.totalorder %s17, 1
      %p133 = scmp.ne.s32.totalorder %s128, %s130
      %p134 = scmp.eq.s32.totalorder %s17, 0
      %p135 = por %p133, %p134
      %p136 = scmp.ne.s32.totalorder %s128, %s130
      %p137 = scmp.eq.s32.totalorder %s22, 1
      %p138 = por %p136, %p137
      %p139 = scmp.ne.s32.totalorder %s130, %s131
      %p140 = scmp.eq.s32.totalorder %s22, 0
      %p141 = por %p139, %p140
      %p142 = scmp.ne.s32.totalorder %s130, %s131
      %p143 = scmp.eq.s32.totalorder %s23, 1
      %p144 = por %p142, %p143
      %p146 = scmp.ne.s32.totalorder %s131, %s145
      %p147 = scmp.eq.s32.totalorder %s23, 0
      %p148 = por %p146, %p147
      %s149 = ssub.s32 %s25, %s32
      %s150 = ssub.s32 %s24, %s36
      %s151 = sor.u32 %s149, %s150
      %p152 = scmp.eq.s32.totalorder %s151, 0
      %s154 = sadd.s32 %s153, 1
      %s155 = scalar_select %p152, %s153, %s154
      %p158 = pneg %p152
      %p159 = scmp.eq.s32.totalorder %s17, 1
      %p160 = por %p158, %p159
      %p161 = scmp.ne.s32.totalorder %s153, %s156
      %p162 = scmp.eq.s32.totalorder %s17, 0
      %p163 = por %p161, %p162
      %p164 = scmp.ne.s32.totalorder %s153, %s156
      %p165 = scmp.eq.s32.totalorder %s22, 1
      %p166 = por %p164, %p165
      %p167 = scmp.ne.s32.totalorder %s156, %s157
      %p168 = scmp.eq.s32.totalorder %s22, 0
      %p169 = por %p167, %p168
      %p170 = scmp.ne.s32.totalorder %s156, %s157
      %p171 = scmp.eq.s32.totalorder %s23, 1
      %p172 = por %p170, %p171
      %p174 = scmp.ne.s32.totalorder %s157, %s173
      %p175 = scmp.eq.s32.totalorder %s23, 0
      %p176 = por %p174, %p175
      %s177 = ssub.s32 %s25, %s32
      %s178 = ssub.s32 %s24, %s36
      %s179 = sor.u32 %s177, %s178
      %p180 = scmp.eq.s32.totalorder %s179, 0
      %s182 = sadd.s32 %s181, 1
      %s183 = scalar_select %p180, %s181, %s182
      %p186 = pneg %p180
      %p187 = scmp.eq.s32.totalorder %s17, 1
      %p188 = por %p186, %p187
      %p189 = scmp.ne.s32.totalorder %s181, %s184
      %p190 = scmp.eq.s32.totalorder %s17, 0
      %p191 = por %p189, %p190
      %p192 = scmp.ne.s32.totalorder %s181, %s184
      %p193 = scmp.eq.s32.totalorder %s22, 1
      %p194 = por %p192, %p193
      %p195 = scmp.ne.s32.totalorder %s184, %s185
      %p196 = scmp.eq.s32.totalorder %s22, 0
      %p197 = por %p195, %p196
      %p198 = scmp.ne.s32.totalorder %s184, %s185
      %p199 = scmp.eq.s32.totalorder %s23, 1
      %p200 = por %p198, %p199
      %p202 = scmp.ne.s32.totalorder %s185, %s201
      %p203 = scmp.eq.s32.totalorder %s23, 0
      %p204 = por %p202, %p203
      %p205 = scmp.le.s32.totalorder 1, %s17
      %p206 = scmp.lt.s32.totalorder %s17, 3
      %p207 = pnand %p205, %p206
      %p208 = pneg %p207
      // Predicated region
      $region9: #{netc5_forward.1} parent=5 // pred_check
        _
      $region10: #{netc5_forward.1} parent=5 // pred_check_branch
        %210 = sbr.rel (%p207) target = $region12
      $region11: #{netc5_forward.1} parent=5 // pred_region
        %s211 = ssub.s32 %s17, 1
        // Predicated region
        $region13: #{netc5_forward.1} parent=11 // pred_check
          %p212 = pneg %p78
        $region14: #{netc5_forward.1} parent=11 // pred_check_branch
          %214 = sbr.rel (%p212) target = $region16
        $region15: #{netc5_forward.1} parent=11 // pred_region
          _
        $region16: #{netc5_forward.1} parent=11 // pred_fallthru
          _
        // Predicated region
        $region17: #{netc5_forward.1} parent=11 // pred_check
          %p215 = pneg %p99
        $region18: #{netc5_forward.1} parent=11 // pred_check_branch
          %217 = sbr.rel (%p215) target = $region20
        $region19: #{netc5_forward.1} parent=11 // pred_region
          %s219 = ssub.s32 2048, 2048
          %220 = vsyncadd [#allocation3], %s219
          %s221 = sshll.u32 [#allocation2], 4
          %s222 = int_to_ptr.vmem [resolvable:$true] %s221
          %227 = dma.hbm_to_vmem [thread:$0]  %s2, 2048, %s222, [#allocation3], 128, 128, 8
        $region20: #{netc5_forward.1} parent=11 // pred_fallthru
          _
        // Predicated region
        $region21: #{netc5_forward.1} parent=11 // pred_check
          %p228 = pneg %p120
        $region22: #{netc5_forward.1} parent=11 // pred_check_branch
          %230 = sbr.rel (%p228) target = $region24
        $region23: #{netc5_forward.1} parent=11 // pred_region
          _
        $region24: #{netc5_forward.1} parent=11 // pred_fallthru
          _
        // Predicated region
        $region25: #{netc5_forward.1} parent=11 // pred_check
          %p231 = pneg %p141
        $region26: #{netc5_forward.1} parent=11 // pred_check_branch
          %233 = sbr.rel (%p231) target = $region28
        $region27: #{netc5_forward.1} parent=11 // pred_region
          _
        $region28: #{netc5_forward.1} parent=11 // pred_fallthru
          _
      $region12: #{netc5_forward.1} parent=5 // pred_fallthru
        _
      %p234 = scmp.lt.s32.totalorder %s17, 2
      // Predicated region
      $region29: #{netc5_forward.1} parent=5 // pred_check
        %p235 = pneg %p234
      $region30: #{netc5_forward.1} parent=5 // pred_check_branch
        %237 = sbr.rel (%p235) target = $region32
      $region31: #{netc5_forward.1} parent=5 // pred_region
        // Predicated region
        $region33: #{netc5_forward.1} parent=31 // pred_check
          %p238 = pneg %p51
        $region34: #{netc5_forward.1} parent=31 // pred_check_branch
          %240 = sbr.rel (%p238) target = $region36
        $region35: #{netc5_forward.1} parent=31 // pred_region
          %p241 = scmp.lt.s32.totalorder %s25, 1
          %s242 = scalar_select %p241, %s25, 1
          %p243 = scmp.lt.s32.totalorder %s24, 0
          %s244 = scalar_select %p243, %s24, 0
          %s245 = smul.addr %s242, 2
          %s246 = sadd.s32 %s244, %s245
          %s247 = smul.addr %s246, 8
          %s248 = scalar_lea.vmem %s0, %s247
        $region36: #{netc5_forward.1} parent=31 // pred_fallthru
          _
      $region32: #{netc5_forward.1} parent=5 // pred_fallthru
        _
      %p249 = scmp.le.s32.totalorder 1, %s17
      %p250 = scmp.lt.s32.totalorder %s17, 3
      %p251 = pnand %p249, %p250
      %p252 = pneg %p251
      // Predicated region
      $region37: #{netc5_forward.1} parent=5 // pred_check
        _
      $region38: #{netc5_forward.1} parent=5 // pred_check_branch
        %254 = sbr.rel (%p251) target = $region40
      $region39: #{netc5_forward.1} parent=5 // pred_region
        %s255 = ssub.s32 %s17, 1
        // Predicated region
        $region41: #{netc5_forward.1} parent=39 // pred_check
          %p256 = pneg %p99
        $region42: #{netc5_forward.1} parent=39 // pred_check_branch
          %258 = sbr.rel (%p256) target = $region44
        $region43: #{netc5_forward.1} parent=39 // pred_region
          %259 = dma.done [#allocation3], 2048
        $region44: #{netc5_forward.1} parent=39 // pred_fallthru
          _
        %p260 = scmp.lt.s32.totalorder %s27, 1
        %s261 = scalar_select %p260, %s27, 1
        %p262 = scmp.lt.s32.totalorder %s26, 0
        %s263 = scalar_select %p262, %s26, 0
        %s264 = smul.addr %s261, 2
        %s265 = sadd.s32 %s263, %s264
        %s266 = smul.addr %s265, 8
        %s267 = scalar_lea.vmem %s0, %s266
        %p268 = pneg %p57
        %p269 = pneg %p54
        %p270 = pneg %p78
        %p271 = pneg %p75
        %p272 = pneg %p99
        %p273 = pneg %p96
        %p274 = pneg %p120
        %p275 = pneg %p117
        %p276 = pneg %p141
        %p277 = pneg %p138
        %p278 = pneg %p169
        %p279 = pneg %p166
        %p280 = scmp.lt.s32.totalorder %s27, 1
        %s281 = scalar_select %p280, %s27, 1
        %p282 = scmp.lt.s32.totalorder %s26, 0
        %s283 = scalar_select %p282, %s26, 0
        %s284 = smul.addr %s281, 4
        %s285 = sadd.s32 %s283, %s284
        %s286 = smul.addr %s285, 8
        %s287 = scalar_lea.vmem %s5, %s286
        %p288 = pneg %p197
        %p289 = pneg %p194
        %s290 = sand.u32 %s184, 1
        %s291 = scalar_lea.sflag [#allocation4], %s290
        %s292 = sand.u32 %s184, 1
        %s293 = smul.addr %s292, 8
        %s294 = scalar_lea.vmem [#allocation5], %s293
        %p295 = scmp.lt.s32.totalorder %s27, 1
        %s296 = scalar_select %p295, %s27, 1
        %p297 = scmp.lt.s32.totalorder %s26, 0
        %s298 = scalar_select %p297, %s26, 0
        %s299 = smul.addr %s296, 2
        %s300 = sadd.s32 %s298, %s299
        %s301 = smul.addr %s300, 8
        %s302 = scalar_lea.vmem %s0, %s301
        %p303 = scmp.lt.s32.totalorder %s27, 1
        %s304 = scalar_select %p303, %s27, 1
        %p305 = scmp.lt.s32.totalorder %s26, 0
        %s306 = scalar_select %p305, %s26, 0
        %s307 = smul.addr %s304, 4
        %s308 = sadd.s32 %s306, %s307
        %s309 = smul.addr %s308, 8
        %s310 = scalar_lea.vmem %s5, %s309
        %v311 = vld [vmem:[%s1] sm:$0xff]
        %v312 = vld [vmem:[%s1 + $0x8] sm:$0xff]
        %v313 = vld [vmem:[%s1 + $0x10] sm:$0xff]
        %v314 = vld [vmem:[%s1 + $0x18] sm:$0xff]
        %v315 = vld [vmem:[#allocation2] sm:$0xff]
        %v316 = vld [vmem:[#allocation2 + $0x8] sm:$0xff]
        %v317 = vld [vmem:[#allocation2 + $0x10] sm:$0xff]
        %v318 = vld [vmem:[#allocation2 + $0x18] sm:$0xff]
        %s319 = scalar_lea.vmem [#allocation2], 32
        %v320 = vld [vmem:[%s319] sm:$0xff]
        %v321 = vld [vmem:[%s319 + $0x8] sm:$0xff]
        %v322 = vld [vmem:[%s319 + $0x10] sm:$0xff]
        %v323 = vld [vmem:[%s319 + $0x18] sm:$0xff]
        %s324 = scalar_lea.vmem [#allocation2], 64
        %v325 = vld [vmem:[%s324] sm:$0xff]
        %v326 = vld [vmem:[%s324 + $0x8] sm:$0xff]
        %v327 = vld [vmem:[%s324 + $0x10] sm:$0xff]
        %v328 = vld [vmem:[%s324 + $0x18] sm:$0xff]
        %s329 = scalar_lea.vmem [#allocation2], 96
        %v330 = vld [vmem:[%s329] sm:$0xff]
        %v331 = vld [vmem:[%s329 + $0x8] sm:$0xff]
        %v332 = vld [vmem:[%s329 + $0x10] sm:$0xff]
        %v333 = vld [vmem:[%s329 + $0x18] sm:$0xff]
        %v334 = vld [vmem:[%s3] sm:$0xff]
        %v335 = vld [vmem:[%s4] sm:$0xff]
        %v336 = vld [vmem:[%s302] sm:$0xff]
        %v337 = vld [vmem:[%s302 + $0x8] sm:$0xff]
        %vm338 = vcmask 130048
        %v340 = vsel %vm338, %v311, 0
        %v343 = vsel %vm338, %v312, 0
        %v346 = vsel %vm338, %v313, 0
        %v349 = vsel %vm338, %v314, 0
        %351 = vmatprep.subr.mxu0 0.0
        %352 = vmatpush1.msra.mxu0 0.0
        %353 = vmatprep.subr.mxu0 0.0
        %354 = vmatpush1.msra.mxu0 0.0
        %355 = vmatprep.subr.mxu0 0.0
        %356 = vmatpush1.msra.mxu0 0.0
        %357 = vmatprep.subr.mxu0 0.0
        %358 = vmatpush1.msra.mxu0 0.0
        %359 = vmatprep.subr.mxu0 0.0
        %360 = vmatpush1.msra.mxu0 0.0
        %361 = vmatprep.subr.mxu0 0.0
        %362 = vmatpush1.msra.mxu0 0.0
        %363 = vmatprep.subr.mxu0 0.0
        %364 = vmatpush1.msra.mxu0 0.0
        %365 = vmatprep.subr.mxu0 0.0
        %366 = vmatpush1.msra.mxu0 0.0
        %367 = vmatprep.subr.mxu0 0.0
        %368 = vmatpush1.msra.mxu0 0.0
        %369 = vmatprep.subr.mxu0 0.0
        %370 = vmatpush1.msra.mxu0 0.0
        %371 = vmatprep.subr.mxu0 0.0
        %372 = vmatpush1.msra.mxu0 0.0
        %373 = vmatprep.subr.mxu0 0.0
        %374 = vmatpush1.msra.mxu0 0.0
        %375 = vmatprep.subr.mxu0 0.0
        %376 = vmatpush1.msra.mxu0 0.0
        %377 = vmatprep.subr.mxu0 0.0
        %378 = vmatpush1.msra.mxu0 0.0
        %379 = vmatprep.subr.mxu0 0.0
        %380 = vmatpush1.msra.mxu0 %v337
        %381 = vmatprep.subr.mxu0 0.0
        %382 = vmatpush1.msra.mxu0 %v336
        %383 = vmatprep.subr.mxu0 0.0
        %384 = vmatpush2.msra.mxu0 0.0
        %385 = vmatprep.subr.mxu0 0.0
        %386 = vmatpush2.msra.mxu0 0.0
        %387 = vmatprep.subr.mxu0 0.0
        %388 = vmatpush2.msra.mxu0 0.0
        %389 = vmatprep.subr.mxu0 0.0
        %390 = vmatpush2.msra.mxu0 0.0
        %391 = vmatprep.subr.mxu0 0.0
        %392 = vmatpush2.msra.mxu0 0.0
        %393 = vmatprep.subr.mxu0 0.0
        %394 = vmatpush2.msra.mxu0 0.0
        %395 = vmatprep.subr.mxu0 0.0
        %396 = vmatpush2.msra.mxu0 0.0
        %397 = vmatprep.subr.mxu0 0.0
        %398 = vmatpush2.msra.mxu0 0.0
        %399 = vmatprep.subr.mxu0 0.0
        %400 = vmatpush2.msra.mxu0 0.0
        %401 = vmatprep.subr.mxu0 0.0
        %402 = vmatpush2.msra.mxu0 0.0
        %403 = vmatprep.subr.mxu0 0.0
        %404 = vmatpush2.msra.mxu0 0.0
        %405 = vmatprep.subr.mxu0 0.0
        %406 = vmatpush2.msra.mxu0 0.0
        %407 = vmatprep.subr.mxu0 0.0
        %408 = vmatpush2.msra.mxu0 0.0
        %409 = vmatprep.subr.mxu0 0.0
        %410 = vmatpush2.msra.mxu0 0.0
        %411 = vmatprep.subr.mxu0 0.0
        %412 = vmatpush2.msra.mxu0 0.0
        %413 = vmatprep.subr.mxu0 0.0
        %414 = vmatpush2.msra.mxu0 0.0
        %415 = vmatprep.mubr.f32.mxu0 0.0
        %416 = vmatmul.mubr.f32.gmra.mxu0 %v340
        %v417 = vpop.f32.mrf.mxu0
        %v418 = vadd.f32 0.0, %v417
        %v419 = vpop.f32.mrf.mxu0
        %420 = vmatprep.mubr.f32.mxu0 0.0
        %421 = vmatmul.mubr.f32.gmra.mxu0 %v343
        %v422 = vpop.f32.mrf.mxu0
        %v423 = vadd.f32 0.0, %v422
        %v424 = vpop.f32.mrf.mxu0
        %425 = vmatprep.mubr.f32.mxu0 0.0
        %426 = vmatmul.mubr.f32.gmra.mxu0 %v346
        %v427 = vpop.f32.mrf.mxu0
        %v428 = vadd.f32 0.0, %v427
        %v429 = vpop.f32.mrf.mxu0
        %430 = vmatprep.mubr.f32.mxu0 0.0
        %431 = vmatmul.mubr.f32.gmra.mxu0 %v349
        %v432 = vpop.f32.mrf.mxu0
        %v433 = vadd.f32 0.0, %v432
        %v434 = vpop.f32.mrf.mxu0
        %435 = vdwg.mxu0
        %v436 = vmul.f32 %v418, 0.2
        %v437 = vmul.f32 %v423, 0.2
        %v438 = vmul.f32 %v428, 0.2
        %v439 = vmul.f32 %v433, 0.2
        %v440 = vmax.f32 %v418, %v436
        %v441 = vmax.f32 %v423, %v437
        %v442 = vmax.f32 %v428, %v438
        %v443 = vmax.f32 %v433, %v439
        %vm444 = vcmask 261120
        %v446 = vsel %vm444, %v315, 0
        %v449 = vsel %vm444, %v316, 0
        %v452 = vsel %vm444, %v317, 0
        %v455 = vsel %vm444, %v318, 0
        %457 = vmatprep.subr.mxu0 0.0
        %458 = vmatpush1.msra.mxu0 0.0
        %459 = vmatprep.subr.mxu0 0.0
        %460 = vmatpush1.msra.mxu0 0.0
        %461 = vmatprep.subr.mxu0 0.0
        %462 = vmatpush1.msra.mxu0 0.0
        %463 = vmatprep.subr.mxu0 0.0
        %464 = vmatpush1.msra.mxu0 0.0
        %465 = vmatprep.subr.mxu0 0.0
        %466 = vmatpush1.msra.mxu0 0.0
        %467 = vmatprep.subr.mxu0 0.0
        %468 = vmatpush1.msra.mxu0 0.0
        %469 = vmatprep.subr.mxu0 0.0
        %470 = vmatpush1.msra.mxu0 0.0
        %471 = vmatprep.subr.mxu0 0.0
        %472 = vmatpush1.msra.mxu0 0.0
        %473 = vmatprep.subr.mxu0 0.0
        %474 = vmatpush1.msra.mxu0 0.0
        %475 = vmatprep.subr.mxu0 0.0
        %476 = vmatpush1.msra.mxu0 0.0
        %477 = vmatprep.subr.mxu0 0.0
        %478 = vmatpush1.msra.mxu0 0.0
        %479 = vmatprep.subr.mxu0 0.0
        %480 = vmatpush1.msra.mxu0 0.0
        %481 = vmatprep.subr.mxu0 0.0
        %482 = vmatpush1.msra.mxu0 %v443
        %483 = vmatprep.subr.mxu0 0.0
        %484 = vmatpush1.msra.mxu0 %v442
        %485 = vmatprep.subr.mxu0 0.0
        %486 = vmatpush1.msra.mxu0 %v441
        %487 = vmatprep.subr.mxu0 0.0
        %488 = vmatpush1.msra.mxu0 %v440
        %489 = vmatprep.subr.mxu0 0.0
        %490 = vmatpush2.msra.mxu0 0.0
        %491 = vmatprep.subr.mxu0 0.0
        %492 = vmatpush2.msra.mxu0 0.0
        %493 = vmatprep.subr.mxu0 0.0
        %494 = vmatpush2.msra.mxu0 0.0
        %495 = vmatprep.subr.mxu0 0.0
        %496 = vmatpush2.msra.mxu0 0.0
        %497 = vmatprep.subr.mxu0 0.0
        %498 = vmatpush2.msra.mxu0 0.0
        %499 = vmatprep.subr.mxu0 0.0
        %500 = vmatpush2.msra.mxu0 0.0
        %501 = vmatprep.subr.mxu0 0.0
        %502 = vmatpush2.msra.mxu0 0.0
        %503 = vmatprep.subr.mxu0 0.0
        %504 = vmatpush2.msra.mxu0 0.0
        %505 = vmatprep.subr.mxu0 0.0
        %506 = vmatpush2.msra.mxu0 0.0
        %507 = vmatprep.subr.mxu0 0.0
        %508 = vmatpush2.msra.mxu0 0.0
        %509 = vmatprep.subr.mxu0 0.0
        %510 = vmatpush2.msra.mxu0 0.0
        %511 = vmatprep.subr.mxu0 0.0
        %512 = vmatpush2.msra.mxu0 0.0
        %513 = vmatprep.subr.mxu0 0.0
        %514 = vmatpush2.msra.mxu0 0.0
        %515 = vmatprep.subr.mxu0 0.0
        %516 = vmatpush2.msra.mxu0 0.0
        %517 = vmatprep.subr.mxu0 0.0
        %518 = vmatpush2.msra.mxu0 0.0
        %519 = vmatprep.subr.mxu0 0.0
        %520 = vmatpush2.msra.mxu0 0.0
        %521 = vmatprep.mubr.f32.mxu0 0.0
        %522 = vmatmul.mubr.f32.gmra.mxu0 %v446
        %v523 = vpop.f32.mrf.mxu0
        %v524 = vadd.f32 0.0, %v523
        %v525 = vpop.f32.mrf.mxu0
        %526 = vmatprep.mubr.f32.mxu0 0.0
        %527 = vmatmul.mubr.f32.gmra.mxu0 %v449
        %v528 = vpop.f32.mrf.mxu0
        %v529 = vadd.f32 0.0, %v528
        %v530 = vpop.f32.mrf.mxu0
        %531 = vmatprep.mubr.f32.mxu0 0.0
        %532 = vmatmul.mubr.f32.gmra.mxu0 %v452
        %v533 = vpop.f32.mrf.mxu0
        %v534 = vadd.f32 0.0, %v533
        %v535 = vpop.f32.mrf.mxu0
        %536 = vmatprep.mubr.f32.mxu0 0.0
        %537 = vmatmul.mubr.f32.gmra.mxu0 %v455
        %v538 = vpop.f32.mrf.mxu0
        %v539 = vadd.f32 0.0, %v538
        %v540 = vpop.f32.mrf.mxu0
        %541 = vdwg.mxu0
        %v542 = vmul.f32 %v524, 0.2
        %v543 = vmul.f32 %v529, 0.2
        %v544 = vmul.f32 %v534, 0.2
        %v545 = vmul.f32 %v539, 0.2
        %v546 = vmax.f32 %v524, %v542
        %v547 = vmax.f32 %v529, %v543
        %v548 = vmax.f32 %v534, %v544
        %v549 = vmax.f32 %v539, %v545
        %v551 = vsel %vm444, %v320, 0
        %v554 = vsel %vm444, %v321, 0
        %v557 = vsel %vm444, %v322, 0
        %v560 = vsel %vm444, %v323, 0
        %562 = vmatprep.subr.mxu0 0.0
        %563 = vmatpush1.msra.mxu0 0.0
        %564 = vmatprep.subr.mxu0 0.0
        %565 = vmatpush1.msra.mxu0 0.0
        %566 = vmatprep.subr.mxu0 0.0
        %567 = vmatpush1.msra.mxu0 0.0
        %568 = vmatprep.subr.mxu0 0.0
        %569 = vmatpush1.msra.mxu0 0.0
        %570 = vmatprep.subr.mxu0 0.0
        %571 = vmatpush1.msra.mxu0 0.0
        %572 = vmatprep.subr.mxu0 0.0
        %573 = vmatpush1.msra.mxu0 0.0
        %574 = vmatprep.subr.mxu0 0.0
        %575 = vmatpush1.msra.mxu0 0.0
        %576 = vmatprep.subr.mxu0 0.0
        %577 = vmatpush1.msra.mxu0 0.0
        %578 = vmatprep.subr.mxu0 0.0
        %579 = vmatpush1.msra.mxu0 0.0
        %580 = vmatprep.subr.mxu0 0.0
        %581 = vmatpush1.msra.mxu0 0.0
        %582 = vmatprep.subr.mxu0 0.0
        %583 = vmatpush1.msra.mxu0 0.0
        %584 = vmatprep.subr.mxu0 0.0
        %585 = vmatpush1.msra.mxu0 0.0
        %586 = vmatprep.subr.mxu0 0.0
        %587 = vmatpush1.msra.mxu0 %v549
        %588 = vmatprep.subr.mxu0 0.0
        %589 = vmatpush1.msra.mxu0 %v548
        %590 = vmatprep.subr.mxu0 0.0
        %591 = vmatpush1.msra.mxu0 %v547
        %592 = vmatprep.subr.mxu0 0.0
        %593 = vmatpush1.msra.mxu0 %v546
        %594 = vmatprep.subr.mxu0 0.0
        %595 = vmatpush2.msra.mxu0 0.0
        %596 = vmatprep.subr.mxu0 0.0
        %597 = vmatpush2.msra.mxu0 0.0
        %598 = vmatprep.subr.mxu0 0.0
        %599 = vmatpush2.msra.mxu0 0.0
        %600 = vmatprep.subr.mxu0 0.0
        %601 = vmatpush2.msra.mxu0 0.0
        %602 = vmatprep.subr.mxu0 0.0
        %603 = vmatpush2.msra.mxu0 0.0
        %604 = vmatprep.subr.mxu0 0.0
        %605 = vmatpush2.msra.mxu0 0.0
        %606 = vmatprep.subr.mxu0 0.0
        %607 = vmatpush2.msra.mxu0 0.0
        %608 = vmatprep.subr.mxu0 0.0
        %609 = vmatpush2.msra.mxu0 0.0
        %610 = vmatprep.subr.mxu0 0.0
        %611 = vmatpush2.msra.mxu0 0.0
        %612 = vmatprep.subr.mxu0 0.0
        %613 = vmatpush2.msra.mxu0 0.0
        %614 = vmatprep.subr.mxu0 0.0
        %615 = vmatpush2.msra.mxu0 0.0
        %616 = vmatprep.subr.mxu0 0.0
        %617 = vmatpush2.msra.mxu0 0.0
        %618 = vmatprep.subr.mxu0 0.0
        %619 = vmatpush2.msra.mxu0 0.0
        %620 = vmatprep.subr.mxu0 0.0
        %621 = vmatpush2.msra.mxu0 0.0
        %622 = vmatprep.subr.mxu0 0.0
        %623 = vmatpush2.msra.mxu0 0.0
        %624 = vmatprep.subr.mxu0 0.0
        %625 = vmatpush2.msra.mxu0 0.0
        %626 = vmatprep.mubr.f32.mxu0 0.0
        %627 = vmatmul.mubr.f32.gmra.mxu0 %v551
        %v628 = vpop.f32.mrf.mxu0
        %v629 = vadd.f32 0.0, %v628
        %v630 = vpop.f32.mrf.mxu0
        %631 = vmatprep.mubr.f32.mxu0 0.0
        %632 = vmatmul.mubr.f32.gmra.mxu0 %v554
        %v633 = vpop.f32.mrf.mxu0
        %v634 = vadd.f32 0.0, %v633
        %v635 = vpop.f32.mrf.mxu0
        %636 = vmatprep.mubr.f32.mxu0 0.0
        %637 = vmatmul.mubr.f32.gmra.mxu0 %v557
        %v638 = vpop.f32.mrf.mxu0
        %v639 = vadd.f32 0.0, %v638
        %v640 = vpop.f32.mrf.mxu0
        %641 = vmatprep.mubr.f32.mxu0 0.0
        %642 = vmatmul.mubr.f32.gmra.mxu0 %v560
        %v643 = vpop.f32.mrf.mxu0
        %v644 = vadd.f32 0.0, %v643
        %v645 = vpop.f32.mrf.mxu0
        %646 = vdwg.mxu0
        %v647 = vmul.f32 %v629, 0.2
        %v648 = vmul.f32 %v634, 0.2
        %v649 = vmul.f32 %v639, 0.2
        %v650 = vmul.f32 %v644, 0.2
        %v651 = vmax.f32 %v629, %v647
        %v652 = vmax.f32 %v634, %v648
        %v653 = vmax.f32 %v639, %v649
        %v654 = vmax.f32 %v644, %v650
        %v656 = vsel %vm444, %v325, 0
        %v659 = vsel %vm444, %v326, 0
        %v662 = vsel %vm444, %v327, 0
        %v665 = vsel %vm444, %v328, 0
        %667 = vmatprep.subr.mxu0 0.0
        %668 = vmatpush1.msra.mxu0 0.0
        %669 = vmatprep.subr.mxu0 0.0
        %670 = vmatpush1.msra.mxu0 0.0
        %671 = vmatprep.subr.mxu0 0.0
        %672 = vmatpush1.msra.mxu0 0.0
        %673 = vmatprep.subr.mxu0 0.0
        %674 = vmatpush1.msra.mxu0 0.0
        %675 = vmatprep.subr.mxu0 0.0
        %676 = vmatpush1.msra.mxu0 0.0
        %677 = vmatprep.subr.mxu0 0.0
        %678 = vmatpush1.msra.mxu0 0.0
        %679 = vmatprep.subr.mxu0 0.0
        %680 = vmatpush1.msra.mxu0 0.0
        %681 = vmatprep.subr.mxu0 0.0
        %682 = vmatpush1.msra.mxu0 0.0
        %683 = vmatprep.subr.mxu0 0.0
        %684 = vmatpush1.msra.mxu0 0.0
        %685 = vmatprep.subr.mxu0 0.0
        %686 = vmatpush1.msra.mxu0 0.0
        %687 = vmatprep.subr.mxu0 0.0
        %688 = vmatpush1.msra.mxu0 0.0
        %689 = vmatprep.subr.mxu0 0.0
        %690 = vmatpush1.msra.mxu0 0.0
        %691 = vmatprep.subr.mxu0 0.0
        %692 = vmatpush1.msra.mxu0 %v654
        %693 = vmatprep.subr.mxu0 0.0
        %694 = vmatpush1.msra.mxu0 %v653
        %695 = vmatprep.subr.mxu0 0.0
        %696 = vmatpush1.msra.mxu0 %v652
        %697 = vmatprep.subr.mxu0 0.0
        %698 = vmatpush1.msra.mxu0 %v651
        %699 = vmatprep.subr.mxu0 0.0
        %700 = vmatpush2.msra.mxu0 0.0
        %701 = vmatprep.subr.mxu0 0.0
        %702 = vmatpush2.msra.mxu0 0.0
        %703 = vmatprep.subr.mxu0 0.0
        %704 = vmatpush2.msra.mxu0 0.0
        %705 = vmatprep.subr.mxu0 0.0
        %706 = vmatpush2.msra.mxu0 0.0
        %707 = vmatprep.subr.mxu0 0.0
        %708 = vmatpush2.msra.mxu0 0.0
        %709 = vmatprep.subr.mxu0 0.0
        %710 = vmatpush2.msra.mxu0 0.0
        %711 = vmatprep.subr.mxu0 0.0
        %712 = vmatpush2.msra.mxu0 0.0
        %713 = vmatprep.subr.mxu0 0.0
        %714 = vmatpush2.msra.mxu0 0.0
        %715 = vmatprep.subr.mxu0 0.0
        %716 = vmatpush2.msra.mxu0 0.0
        %717 = vmatprep.subr.mxu0 0.0
        %718 = vmatpush2.msra.mxu0 0.0
        %719 = vmatprep.subr.mxu0 0.0
        %720 = vmatpush2.msra.mxu0 0.0
        %721 = vmatprep.subr.mxu0 0.0
        %722 = vmatpush2.msra.mxu0 0.0
        %723 = vmatprep.subr.mxu0 0.0
        %724 = vmatpush2.msra.mxu0 0.0
        %725 = vmatprep.subr.mxu0 0.0
        %726 = vmatpush2.msra.mxu0 0.0
        %727 = vmatprep.subr.mxu0 0.0
        %728 = vmatpush2.msra.mxu0 0.0
        %729 = vmatprep.subr.mxu0 0.0
        %730 = vmatpush2.msra.mxu0 0.0
        %731 = vmatprep.mubr.f32.mxu0 0.0
        %732 = vmatmul.mubr.f32.gmra.mxu0 %v656
        %v733 = vpop.f32.mrf.mxu0
        %v734 = vadd.f32 0.0, %v733
        %v735 = vpop.f32.mrf.mxu0
        %736 = vmatprep.mubr.f32.mxu0 0.0
        %737 = vmatmul.mubr.f32.gmra.mxu0 %v659
        %v738 = vpop.f32.mrf.mxu0
        %v739 = vadd.f32 0.0, %v738
        %v740 = vpop.f32.mrf.mxu0
        %741 = vmatprep.mubr.f32.mxu0 0.0
        %742 = vmatmul.mubr.f32.gmra.mxu0 %v662
        %v743 = vpop.f32.mrf.mxu0
        %v744 = vadd.f32 0.0, %v743
        %v745 = vpop.f32.mrf.mxu0
        %746 = vmatprep.mubr.f32.mxu0 0.0
        %747 = vmatmul.mubr.f32.gmra.mxu0 %v665
        %v748 = vpop.f32.mrf.mxu0
        %v749 = vadd.f32 0.0, %v748
        %v750 = vpop.f32.mrf.mxu0
        %751 = vdwg.mxu0
        %v752 = vmul.f32 %v734, 0.2
        %v753 = vmul.f32 %v739, 0.2
        %v754 = vmul.f32 %v744, 0.2
        %v755 = vmul.f32 %v749, 0.2
        %v756 = vmax.f32 %v734, %v752
        %v757 = vmax.f32 %v739, %v753
        %v758 = vmax.f32 %v744, %v754
        %v759 = vmax.f32 %v749, %v755
        %v761 = vsel %vm444, %v330, 0
        %v764 = vsel %vm444, %v331, 0
        %v767 = vsel %vm444, %v332, 0
        %v770 = vsel %vm444, %v333, 0
        %772 = vmatprep.subr.mxu0 0.0
        %773 = vmatpush1.msra.mxu0 0.0
        %774 = vmatprep.subr.mxu0 0.0
        %775 = vmatpush1.msra.mxu0 0.0
        %776 = vmatprep.subr.mxu0 0.0
        %777 = vmatpush1.msra.mxu0 0.0
        %778 = vmatprep.subr.mxu0 0.0
        %779 = vmatpush1.msra.mxu0 0.0
        %780 = vmatprep.subr.mxu0 0.0
        %781 = vmatpush1.msra.mxu0 0.0
        %782 = vmatprep.subr.mxu0 0.0
        %783 = vmatpush1.msra.mxu0 0.0
        %784 = vmatprep.subr.mxu0 0.0
        %785 = vmatpush1.msra.mxu0 0.0
        %786 = vmatprep.subr.mxu0 0.0
        %787 = vmatpush1.msra.mxu0 0.0
        %788 = vmatprep.subr.mxu0 0.0
        %789 = vmatpush1.msra.mxu0 0.0
        %790 = vmatprep.subr.mxu0 0.0
        %791 = vmatpush1.msra.mxu0 0.0
        %792 = vmatprep.subr.mxu0 0.0
        %793 = vmatpush1.msra.mxu0 0.0
        %794 = vmatprep.subr.mxu0 0.0
        %795 = vmatpush1.msra.mxu0 0.0
        %796 = vmatprep.subr.mxu0 0.0
        %797 = vmatpush1.msra.mxu0 %v759
        %798 = vmatprep.subr.mxu0 0.0
        %799 = vmatpush1.msra.mxu0 %v758
        %800 = vmatprep.subr.mxu0 0.0
        %801 = vmatpush1.msra.mxu0 %v757
        %802 = vmatprep.subr.mxu0 0.0
        %803 = vmatpush1.msra.mxu0 %v756
        %804 = vmatprep.subr.mxu0 0.0
        %805 = vmatpush2.msra.mxu0 0.0
        %806 = vmatprep.subr.mxu0 0.0
        %807 = vmatpush2.msra.mxu0 0.0
        %808 = vmatprep.subr.mxu0 0.0
        %809 = vmatpush2.msra.mxu0 0.0
        %810 = vmatprep.subr.mxu0 0.0
        %811 = vmatpush2.msra.mxu0 0.0
        %812 = vmatprep.subr.mxu0 0.0
        %813 = vmatpush2.msra.mxu0 0.0
        %814 = vmatprep.subr.mxu0 0.0
        %815 = vmatpush2.msra.mxu0 0.0
        %816 = vmatprep.subr.mxu0 0.0
        %817 = vmatpush2.msra.mxu0 0.0
        %818 = vmatprep.subr.mxu0 0.0
        %819 = vmatpush2.msra.mxu0 0.0
        %820 = vmatprep.subr.mxu0 0.0
        %821 = vmatpush2.msra.mxu0 0.0
        %822 = vmatprep.subr.mxu0 0.0
        %823 = vmatpush2.msra.mxu0 0.0
        %824 = vmatprep.subr.mxu0 0.0
        %825 = vmatpush2.msra.mxu0 0.0
        %826 = vmatprep.subr.mxu0 0.0
        %827 = vmatpush2.msra.mxu0 0.0
        %828 = vmatprep.subr.mxu0 0.0
        %829 = vmatpush2.msra.mxu0 0.0
        %830 = vmatprep.subr.mxu0 0.0
        %831 = vmatpush2.msra.mxu0 0.0
        %832 = vmatprep.subr.mxu0 0.0
        %833 = vmatpush2.msra.mxu0 0.0
        %834 = vmatprep.subr.mxu0 0.0
        %835 = vmatpush2.msra.mxu0 0.0
        %836 = vmatprep.mubr.f32.mxu0 0.0
        %837 = vmatmul.mubr.f32.gmra.mxu0 %v761
        %v838 = vpop.f32.mrf.mxu0
        %v839 = vadd.f32 0.0, %v838
        %v840 = vpop.f32.mrf.mxu0
        %841 = vmatprep.mubr.f32.mxu0 0.0
        %842 = vmatmul.mubr.f32.gmra.mxu0 %v764
        %v843 = vpop.f32.mrf.mxu0
        %v844 = vadd.f32 0.0, %v843
        %v845 = vpop.f32.mrf.mxu0
        %846 = vmatprep.mubr.f32.mxu0 0.0
        %847 = vmatmul.mubr.f32.gmra.mxu0 %v767
        %v848 = vpop.f32.mrf.mxu0
        %v849 = vadd.f32 0.0, %v848
        %v850 = vpop.f32.mrf.mxu0
        %851 = vmatprep.mubr.f32.mxu0 0.0
        %852 = vmatmul.mubr.f32.gmra.mxu0 %v770
        %v853 = vpop.f32.mrf.mxu0
        %v854 = vadd.f32 0.0, %v853
        %v855 = vpop.f32.mrf.mxu0
        %856 = vdwg.mxu0
        %857 = vst [vmem:[%s310] sm:$0xff] %v839
        %858 = vst [vmem:[%s310 + $0x8] sm:$0xff] %v844
        %859 = vst [vmem:[%s310 + $0x10] sm:$0xff] %v849
        %860 = vst [vmem:[%s310 + $0x18] sm:$0xff] %v854
        %v861 = vmul.f32 %v839, 0.2
        %v862 = vmul.f32 %v844, 0.2
        %v863 = vmul.f32 %v849, 0.2
        %v864 = vmul.f32 %v854, 0.2
        %v865 = vmax.f32 %v839, %v861
        %v866 = vmax.f32 %v844, %v862
        %v867 = vmax.f32 %v849, %v863
        %v868 = vmax.f32 %v854, %v864
        %870 = vset.pattern.permute.xlu0 0
        %871 = vperm.xlu0 %870, %v335
        %v872 = vpop.permute.xlu0 %871
        %v875 = vsel %vm444, %v334, 0
        %877 = vmatprep.subr.mxu0 0.0
        %878 = vmatpush1.msra.mxu0 0.0
        %879 = vmatprep.subr.mxu0 0.0
        %880 = vmatpush1.msra.mxu0 0.0
        %881 = vmatprep.subr.mxu0 0.0
        %882 = vmatpush1.msra.mxu0 0.0
        %883 = vmatprep.subr.mxu0 0.0
        %884 = vmatpush1.msra.mxu0 0.0
        %885 = vmatprep.subr.mxu0 0.0
        %886 = vmatpush1.msra.mxu0 0.0
        %887 = vmatprep.subr.mxu0 0.0
        %888 = vmatpush1.msra.mxu0 0.0
        %889 = vmatprep.subr.mxu0 0.0
        %890 = vmatpush1.msra.mxu0 0.0
        %891 = vmatprep.subr.mxu0 0.0
        %892 = vmatpush1.msra.mxu0 0.0
        %893 = vmatprep.subr.mxu0 0.0
        %894 = vmatpush1.msra.mxu0 0.0
        %895 = vmatprep.subr.mxu0 0.0
        %896 = vmatpush1.msra.mxu0 0.0
        %897 = vmatprep.subr.mxu0 0.0
        %898 = vmatpush1.msra.mxu0 0.0
        %899 = vmatprep.subr.mxu0 0.0
        %900 = vmatpush1.msra.mxu0 0.0
        %901 = vmatprep.subr.mxu0 0.0
        %902 = vmatpush1.msra.mxu0 %v868
        %903 = vmatprep.subr.mxu0 0.0
        %904 = vmatpush1.msra.mxu0 %v867
        %905 = vmatprep.subr.mxu0 0.0
        %906 = vmatpush1.msra.mxu0 %v866
        %907 = vmatprep.subr.mxu0 0.0
        %908 = vmatpush1.msra.mxu0 %v865
        %909 = vmatprep.subr.mxu0 0.0
        %910 = vmatpush2.msra.mxu0 0.0
        %911 = vmatprep.subr.mxu0 0.0
        %912 = vmatpush2.msra.mxu0 0.0
        %913 = vmatprep.subr.mxu0 0.0
        %914 = vmatpush2.msra.mxu0 0.0
        %915 = vmatprep.subr.mxu0 0.0
        %916 = vmatpush2.msra.mxu0 0.0
        %917 = vmatprep.subr.mxu0 0.0
        %918 = vmatpush2.msra.mxu0 0.0
        %919 = vmatprep.subr.mxu0 0.0
        %920 = vmatpush2.msra.mxu0 0.0
        %921 = vmatprep.subr.mxu0 0.0
        %922 = vmatpush2.msra.mxu0 0.0
        %923 = vmatprep.subr.mxu0 0.0
        %924 = vmatpush2.msra.mxu0 0.0
        %925 = vmatprep.subr.mxu0 0.0
        %926 = vmatpush2.msra.mxu0 0.0
        %927 = vmatprep.subr.mxu0 0.0
        %928 = vmatpush2.msra.mxu0 0.0
        %929 = vmatprep.subr.mxu0 0.0
        %930 = vmatpush2.msra.mxu0 0.0
        %931 = vmatprep.subr.mxu0 0.0
        %932 = vmatpush2.msra.mxu0 0.0
        %933 = vmatprep.subr.mxu0 0.0
        %934 = vmatpush2.msra.mxu0 0.0
        %935 = vmatprep.subr.mxu0 0.0
        %936 = vmatpush2.msra.mxu0 0.0
        %937 = vmatprep.subr.mxu0 0.0
        %938 = vmatpush2.msra.mxu0 0.0
        %939 = vmatprep.subr.mxu0 0.0
        %940 = vmatpush2.msra.mxu0 0.0
        %941 = vmatprep.mubr.f32.mxu0 0.0
        %942 = vmatmul.mubr.f32.gmra.mxu0 %v875
        %v943 = vpop.f32.mrf.mxu0
        %v944 = vadd.f32 %v872, %v943
        %v945 = vpop.f32.mrf.mxu0
        %946 = vdwg.mxu0
        %947 = vst [vmem:[%s294] sm:$0xff] %v944
        %p948 = scmp.lt.s32.totalorder %s27, 1
        %s949 = scalar_select %p948, %s27, 1
        %p950 = scmp.lt.s32.totalorder %s26, 0
        %s951 = scalar_select %p950, %s26, 0
        %s952 = smul.addr %s949, 4
        %s953 = sadd.s32 %s951, %s952
        %s954 = smul.addr %s953, 8
        %s955 = scalar_lea.vmem %s5, %s954
        %s956 = sand.u32 %s184, 1
        %s957 = scalar_lea.sflag [#allocation4], %s956
        %s958 = sand.u32 %s184, 1
        %s959 = smul.addr %s958, 8
        %s960 = scalar_lea.vmem [#allocation5], %s959
        // Predicated region
        $region45: #{netc5_forward.1} parent=39 // pred_check
          %p961 = pneg %p166
        $region46: #{netc5_forward.1} parent=39 // pred_check_branch
          %963 = sbr.rel (%p961) target = $region48
        $region47: #{netc5_forward.1} parent=39 // pred_region
          _
        $region48: #{netc5_forward.1} parent=39 // pred_fallthru
          _
        // Predicated region
        $region49: #{netc5_forward.1} parent=39 // pred_check
          %p964 = pneg %p194
        $region50: #{netc5_forward.1} parent=39 // pred_check_branch
          %966 = sbr.rel (%p964) target = $region52
        $region51: #{netc5_forward.1} parent=39 // pred_region
          %s968 = ssub.s32 128, 128
          %969 = vsyncadd %s957, %s968
          %s970 = sadd.s32 %s26, %s27
          %s971 = smul.addr %s970, 128
          %s972 = scalar_lea.hbm %s6, %s971
          %s974 = sshll.u32 %s960, 4
          %s975 = int_to_ptr.vmem [resolvable:$true] %s974
          %977 = dma.vmem_to_hbm [thread:$0]  %s975, 128, %s972, %s957
        $region52: #{netc5_forward.1} parent=39 // pred_fallthru
          _
      $region40: #{netc5_forward.1} parent=5 // pred_fallthru
        _
      %p978 = scmp.le.s32.totalorder 2, %s17
      // Predicated region
      $region53: #{netc5_forward.1} parent=5 // pred_check
        %p979 = pneg %p978
      $region54: #{netc5_forward.1} parent=5 // pred_check_branch
        %981 = sbr.rel (%p979) target = $region56
      $region55: #{netc5_forward.1} parent=5 // pred_region
        %s982 = ssub.s32 %s17, 2
        // Predicated region
        $region57: #{netc5_forward.1} parent=55 // pred_check
          %p983 = pneg %p172
        $region58: #{netc5_forward.1} parent=55 // pred_check_branch
          %985 = sbr.rel (%p983) target = $region60
        $region59: #{netc5_forward.1} parent=55 // pred_region
          %p986 = scmp.lt.s32.totalorder %s29, 1
          %s987 = scalar_select %p986, %s29, 1
          %p988 = scmp.lt.s32.totalorder %s28, 0
          %s989 = scalar_select %p988, %s28, 0
          %s990 = smul.addr %s987, 4
          %s991 = sadd.s32 %s989, %s990
          %s992 = smul.addr %s991, 8
          %s993 = scalar_lea.vmem %s5, %s992
        $region60: #{netc5_forward.1} parent=55 // pred_fallthru
          _
        // Predicated region
        $region61: #{netc5_forward.1} parent=55 // pred_check
          %p994 = pneg %p200
        $region62: #{netc5_forward.1} parent=55 // pred_check_branch
          %996 = sbr.rel (%p994) target = $region64
        $region63: #{netc5_forward.1} parent=55 // pred_region
          %s997 = sand.u32 %s185, 1
          %s998 = scalar_lea.sflag [#allocation4], %s997
          %s999 = sand.u32 %s185, 1
          %s1000 = smul.addr %s999, 8
          %s1001 = scalar_lea.vmem [#allocation5], %s1000
          %1002 = dma.done %s998, 128
        $region64: #{netc5_forward.1} parent=55 // pred_fallthru
          _
      $region56: #{netc5_forward.1} parent=5 // pred_fallthru
        _
    $region6: #{netc5_forward.1} parent=1 // loop_footer
      %s21 = sadd.s32 1, %s17
    $region7: #{netc5_forward.1} parent=1 // loop_footer_branch
      %16 = sbr.rel target = $region3
    $region8: #{netc5_forward.1} parent=1 // loop_exit
      _
    %1003 = vsyncpa [#allocation3], 1
    %s1004 = scalar_lea.sflag [#allocation3], 1
    %1005 = vsyncpa %s1004, 1
    %1006 = vsyncpa [#allocation4], 1
    %s1007 = scalar_lea.sflag [#allocation4], 1
    %1008 = vsyncpa %s1007, 1

</llo_original>
